<compile_context>
chip_gen: v7x
topology: tpu7x:2x2x1
jax: 0.10.0
libtpu: 0.0.40
codegen_flags: <defaults>
</compile_context>

<pallas_src>
import functools

import jax
import jax.numpy as jnp
from jax import lax
from jax.experimental import pallas as pl
from jax.experimental.pallas import tpu as pltpu


# ----------------------------- Pallas kernel ------------------------------- #
def _shared_bottom_kernel(n_hidden, task_types, x_ref, *refs):
    """Fused bottom MLP + fused towers + fused prediction heads.

    refs = [W, b] * n_hidden            (bottom layers, then fused tower layers)
         + [W_head, b_head]             (fused per-task output heads)
         + [out_ref]
    """
    out_ref = refs[-1]
    params = refs[:-1]

    h = x_ref[...]
    # Hidden layers (BN folded into W/b in glue): Linear -> ReLU.
    for l in range(n_hidden):
        w_ref, b_ref = params[2 * l], params[2 * l + 1]
        h = jnp.maximum(
            jnp.dot(h.astype(w_ref.dtype), w_ref[...],
                    preferred_element_type=jnp.float32) + b_ref[...],
            0.0)

    # Fused output heads: one (hidden, n_task) matmul.
    w_ref, b_ref = params[2 * n_hidden], params[2 * n_hidden + 1]
    y = jnp.dot(h.astype(w_ref.dtype), w_ref[...],
                preferred_element_type=jnp.float32) + b_ref[...]

    # Prediction layers: selective sigmoid per task column (trace-time branch).
    is_cls = [t == "classification" for t in task_types]
    if all(is_cls):
        y = jax.nn.sigmoid(y)
    elif any(is_cls):
        col = lax.broadcasted_iota(jnp.int32, y.shape, 1)
        mask = jnp.zeros(y.shape, jnp.bool_)
        for t, c in enumerate(is_cls):
            if c:
                mask = jnp.logical_or(mask, col == t)
        y = jnp.where(mask, jax.nn.sigmoid(y), y)

    # Single lane-dense store (torch.cat(ys, dim=1)).
    out_ref[...] = y


def shared_bottom_forward(x_emb, flat_params, *, n_hidden_layers, task_types,
                          block_b=None):
    """x_emb: (B, D) float32 embedded+concatenated features."""
    batch, dim = x_emb.shape
    n_task = len(task_types)
    if block_b is None:
        # Tile the batch when it is large (mandatory on v7x: 2 TCs, 64 MiB VMEM);
        # at small batch this is a single grid step.
        block_b = batch if batch <= 256 else 256
    grid = (pl.cdiv(batch, block_b),)

    kernel = functools.partial(_shared_bottom_kernel, n_hidden_layers,
                               tuple(task_types))
    x_spec = pl.BlockSpec((block_b, dim), lambda i: (i, 0))
    # Weights/biases: whole-array, VMEM-resident across all grid steps.
    w_spec = pl.BlockSpec(memory_space=pltpu.MemorySpace.VMEM)
    out_spec = pl.BlockSpec((block_b, n_task), lambda i: (i, 0))

    return pl.pallas_call(
        kernel,
        out_shape=jax.ShapeDtypeStruct((batch, n_task), jnp.float32),
        grid=grid,
        in_specs=[x_spec] + [w_spec] * len(flat_params),
        out_specs=out_spec,
        compiler_params=pltpu.CompilerParams(
            dimension_semantics=("parallel",)),
    )(x_emb, *flat_params)


# ----------------------------- parameter setup ----------------------------- #
def _make_linear(key, in_dim, out_dim):
    kw, kb = jax.random.split(key)
    bound = 1.0 / jnp.sqrt(in_dim)
    w = jax.random.uniform(kw, (in_dim, out_dim), jnp.float32, -bound, bound)
    b = jax.random.uniform(kb, (out_dim,), jnp.float32, -bound, bound)
    return w, b


def _make_mlp(key, in_dim, dims, output_layer):
    """Structured (unfolded) params matching torch_rechub's MLP.

    Each hidden layer: Linear -> BatchNorm1d(eval) -> ReLU -> Dropout(eval).
    If output_layer: trailing Linear(d, 1).
    """
    layers = []
    d = in_dim
    for hdim in dims:
        key, kl, kg, kv = jax.random.split(key, 4)
        w, b = _make_linear(kl, d, hdim)
        gamma = 1.0 + 0.1 * jax.random.normal(kg, (hdim,), jnp.float32)
        beta = 0.05 * jnp.ones((hdim,), jnp.float32)
        rmean = 0.01 * jnp.arange(hdim, dtype=jnp.float32)
        rvar = 1.0 + 0.1 * jnp.abs(jax.random.normal(kv, (hdim,), jnp.float32))
        layers.append(dict(w=w, b=b, gamma=gamma, beta=beta,
                           rmean=rmean, rvar=rvar))
        d = hdim
    head = None
    if output_layer:
        key, kl = jax.random.split(key)
        head = _make_linear(kl, d, 1)
    return layers, head


def _fold_layer(layer, eps=1e-5):
    """Fold eval-mode BatchNorm1d + Linear bias into (W', b')."""
    scale = layer["gamma"] / jnp.sqrt(layer["rvar"] + eps)
    shift = layer["beta"] - layer["rmean"] * scale
    w = layer["w"] * scale[None, :]
    b = (layer["b"] * scale + shift)[None, :]
    return w, b


def build_kernel_params(bottom_layers, towers, tower_heads,
                        param_dtype=jnp.float32):
    """Fold BN into the Linears and fuse all task towers/heads into block matrices.

    Returns (flat [W, b, W, b, ...] list, number_of_hidden_layers).
    Set param_dtype=jnp.bfloat16 on v6e/v7x to use the native bf16 MXU path
    (biases stay f32; accumulation stays f32 in the kernel).
    """
    flat = []
    for layer in bottom_layers:
        w, b = _fold_layer(layer)
        flat += [w.astype(param_dtype), b]

    depths = {len(t) for t in towers}
    assert len(depths) == 1, "tower fusion requires equal tower depths"
    # TODO(synk): unequal tower depths would need identity-padding of shallow towers.
    depth = depths.pop()

    for l in range(depth):
        ws, bs = zip(*[_fold_layer(t[l]) for t in towers])
        if l == 0:
            w = jnp.concatenate(ws, axis=1)            # shared bottom-MLP input
        else:
            w = jax.scipy.linalg.block_diag(*ws)       # independent tower paths
        b = jnp.concatenate(bs, axis=1)
        flat += [w.astype(param_dtype), b]

    # Fused output heads -> single (hidden, n_task) matmul.
    head_ws = [wh for wh, _ in tower_heads]
    head_bs = [bh[None, :] for _, bh in tower_heads]
    if depth == 0:
        w = jnp.concatenate(head_ws, axis=1)
    else:
        w = jax.scipy.linalg.block_diag(*head_ws)
    b = jnp.concatenate(head_bs, axis=1)
    flat += [w.astype(param_dtype), b]

    n_hidden = len(bottom_layers) + depth
    return flat, n_hidden


# ------------------------------- reference --------------------------------- #
def _reference_forward(x, bottom_layers, towers, tower_heads, task_types,
                       eps=1e-5):
    """Pure-JAX reference with explicit (unfolded, unfused) per-task math."""
    def mlp_hidden(h, layers):
        for L in layers:
            h = h @ L["w"] + L["b"]
            h = (h - L["rmean"]) / jnp.sqrt(L["rvar"] + eps) * L["gamma"] + L["beta"]
            h = jnp.maximum(h, 0.0)
        return h

    h = mlp_hidden(x, bottom_layers)
    ys = []
    for t, task_type in enumerate(task_types):
        th = mlp_hidden(h, towers[t])
        w, b = tower_heads[t]
        y = th @ w + b
        if task_type == "classification":
            y = jax.nn.sigmoid(y)
        ys.append(y)
    return jnp.concatenate(ys, axis=1)


# ---------------------------------- main ----------------------------------- #
if __name__ == "__main__":
    key = jax.random.PRNGKey(0)

    # Synthetic "features": 4 sparse features, vocab 10, embed_dim 8 each.
    n_features, vocab_size, embed_dim = 4, 10, 8
    bottom_dims = n_features * embed_dim              # 32
    batch = 8

    task_types = ["classification", "regression"]
    bottom_hidden = [64, 32]                          # bottom_params["dims"]
    tower_hidden = [[16], [16]]                       # tower_params_list[i]["dims"]

    # Embedding tables (EmbeddingLayer).
    key, ke = jax.random.split(key)
    emb_tables = [
        jax.random.normal(k, (vocab_size, embed_dim), jnp.float32) * 0.1
        for k in jax.random.split(ke, n_features)
    ]

    # Bottom MLP (output_layer=False) + per-task towers (output_layer=True).
    key, kb = jax.random.split(key)
    bottom_layers, _ = _make_mlp(kb, bottom_dims, bottom_hidden,
                                 output_layer=False)
    towers, tower_heads = [], []
    for dims in tower_hidden:
        key, kt = jax.random.split(key)
        layers, head = _make_mlp(kt, bottom_hidden[-1], dims, output_layer=True)
        towers.append(layers)
        tower_heads.append(head)

    # Input: integer sparse-feature ids (batch, n_features).
    key, kx = jax.random.split(key)
    x_ids = jax.random.randint(kx, (batch, n_features), 0, vocab_size)

    # Glue: embedding lookup + concat (squeeze_dim=True) -> (batch, bottom_dims).
    x_emb = jnp.concatenate(
        [emb_tables[i][x_ids[:, i]] for i in range(n_features)], axis=1
    )

    # Fold BN into weights, fuse towers/heads (f32; use jnp.bfloat16 on v6e/v7x).
    flat_params, n_hidden = build_kernel_params(bottom_layers, towers,
                                                tower_heads,
                                                param_dtype=jnp.float32)

    out = shared_bottom_forward(x_emb, flat_params,
                                n_hidden_layers=n_hidden,
                                task_types=task_types)
    out = jax.block_until_ready(out)

    ref = _reference_forward(x_emb, bottom_layers, towers, tower_heads,
                             task_types)
    assert out.shape == (batch, len(task_types))
    assert jnp.allclose(out, ref, atol=1e-5, rtol=1e-5), (out, ref)

    print("KERNEL_OK")
</pallas_src>

<mosaic_0001>
module attributes {stable_mosaic.version = 11 : i64} {
  func.func @_shared_bottom_kernel(%arg0: i32, %arg1: memref<8x32xf32, #tpu.memory_space<vmem>>, %arg2: memref<32x64xf32, #tpu.memory_space<vmem>>, %arg3: memref<1x64xf32, #tpu.memory_space<vmem>>, %arg4: memref<64x32xf32, #tpu.memory_space<vmem>>, %arg5: memref<1x32xf32, #tpu.memory_space<vmem>>, %arg6: memref<32x32xf32, #tpu.memory_space<vmem>>, %arg7: memref<1x32xf32, #tpu.memory_space<vmem>>, %arg8: memref<32x2xf32, #tpu.memory_space<vmem>>, %arg9: memref<1x2xf32, #tpu.memory_space<vmem>>, %arg10: memref<8x2xf32, #tpu.memory_space<vmem>>) attributes {dimension_semantics = [#tpu.dimension_semantics<parallel>], iteration_bounds = array<i64: 1>, scalar_prefetch = 0 : i64, scratch_operands = 0 : i64, tpu.core_type = #tpu.core_type<tc>, window_params = [{transform_indices = @transform_0, window_bounds = array<i64: 8, 32>}, {pipeline_mode = #tpu.pipeline_mode<synchronous>, transform_indices = @transform_1, window_bounds = array<i64: 32, 64>}, {pipeline_mode = #tpu.pipeline_mode<synchronous>, transform_indices = @transform_2, window_bounds = array<i64: 1, 64>}, {pipeline_mode = #tpu.pipeline_mode<synchronous>, transform_indices = @transform_3, window_bounds = array<i64: 64, 32>}, {pipeline_mode = #tpu.pipeline_mode<synchronous>, transform_indices = @transform_4, window_bounds = array<i64: 1, 32>}, {pipeline_mode = #tpu.pipeline_mode<synchronous>, transform_indices = @transform_5, window_bounds = array<i64: 32, 32>}, {pipeline_mode = #tpu.pipeline_mode<synchronous>, transform_indices = @transform_6, window_bounds = array<i64: 1, 32>}, {pipeline_mode = #tpu.pipeline_mode<synchronous>, transform_indices = @transform_7, window_bounds = array<i64: 32, 2>}, {pipeline_mode = #tpu.pipeline_mode<synchronous>, transform_indices = @transform_8, window_bounds = array<i64: 1, 2>}, {transform_indices = @transform_9, window_bounds = array<i64: 8, 2>}]} {
    %c0 = arith.constant 0 : index
    %c0_0 = arith.constant 0 : index
    %0 = vector.load %arg1[%c0, %c0_0] : memref<8x32xf32, #tpu.memory_space<vmem>>, vector<8x32xf32>
    %c0_1 = arith.constant 0 : index
    %c0_2 = arith.constant 0 : index
    %1 = vector.load %arg2[%c0_1, %c0_2] : memref<32x64xf32, #tpu.memory_space<vmem>>, vector<32x64xf32>
    %cst = arith.constant dense<0.000000e+00> : vector<8x64xf32>
    %2 = tpu.matmul %0, %1, %cst {dimension_numbers = #tpu.dot_dimension_numbers<[1], [0], [0], [1], [0, 0, 1, 1], [], []>} : vector<8x32xf32>, vector<32x64xf32>, vector<8x64xf32> -> vector<8x64xf32>
    %c0_3 = arith.constant 0 : index
    %c0_4 = arith.constant 0 : index
    %3 = vector.load %arg3[%c0_3, %c0_4] : memref<1x64xf32, #tpu.memory_space<vmem>>, vector<1x64xf32>
    %4 = vector.broadcast %3 : vector<1x64xf32> to vector<8x64xf32>
    %5 = arith.addf %2, %4 : vector<8x64xf32>
    %cst_5 = arith.constant 0.000000e+00 : f32
    %6 = vector.broadcast %cst_5 : f32 to vector<8x64xf32>
    %7 = arith.maximumf %5, %6 : vector<8x64xf32>
    %c0_6 = arith.constant 0 : index
    %c0_7 = arith.constant 0 : index
    %8 = vector.load %arg4[%c0_6, %c0_7] : memref<64x32xf32, #tpu.memory_space<vmem>>, vector<64x32xf32>
    %cst_8 = arith.constant dense<0.000000e+00> : vector<8x32xf32>
    %9 = tpu.matmul %7, %8, %cst_8 {dimension_numbers = #tpu.dot_dimension_numbers<[1], [0], [0], [1], [0, 0, 1, 1], [], []>} : vector<8x64xf32>, vector<64x32xf32>, vector<8x32xf32> -> vector<8x32xf32>
    %c0_9 = arith.constant 0 : index
    %c0_10 = arith.constant 0 : index
    %10 = vector.load %arg5[%c0_9, %c0_10] : memref<1x32xf32, #tpu.memory_space<vmem>>, vector<1x32xf32>
    %11 = vector.broadcast %10 : vector<1x32xf32> to vector<8x32xf32>
    %12 = arith.addf %9, %11 : vector<8x32xf32>
    %cst_11 = arith.constant 0.000000e+00 : f32
    %13 = vector.broadcast %cst_11 : f32 to vector<8x32xf32>
    %14 = arith.maximumf %12, %13 : vector<8x32xf32>
    %c0_12 = arith.constant 0 : index
    %c0_13 = arith.constant 0 : index
    %15 = vector.load %arg6[%c0_12, %c0_13] : memref<32x32xf32, #tpu.memory_space<vmem>>, vector<32x32xf32>
    %cst_14 = arith.constant dense<0.000000e+00> : vector<8x32xf32>
    %16 = tpu.matmul %14, %15, %cst_14 {dimension_numbers = #tpu.dot_dimension_numbers<[1], [0], [0], [1], [0, 0, 1, 1], [], []>} : vector<8x32xf32>, vector<32x32xf32>, vector<8x32xf32> -> vector<8x32xf32>
    %c0_15 = arith.constant 0 : index
    %c0_16 = arith.constant 0 : index
    %17 = vector.load %arg7[%c0_15, %c0_16] : memref<1x32xf32, #tpu.memory_space<vmem>>, vector<1x32xf32>
    %18 = vector.broadcast %17 : vector<1x32xf32> to vector<8x32xf32>
    %19 = arith.addf %16, %18 : vector<8x32xf32>
    %cst_17 = arith.constant 0.000000e+00 : f32
    %20 = vector.broadcast %cst_17 : f32 to vector<8x32xf32>
    %21 = arith.maximumf %19, %20 : vector<8x32xf32>
    %c0_18 = arith.constant 0 : index
    %c0_19 = arith.constant 0 : index
    %22 = vector.load %arg8[%c0_18, %c0_19] : memref<32x2xf32, #tpu.memory_space<vmem>>, vector<32x2xf32>
    %cst_20 = arith.constant dense<0.000000e+00> : vector<8x2xf32>
    %23 = tpu.matmul %21, %22, %cst_20 {dimension_numbers = #tpu.dot_dimension_numbers<[1], [0], [0], [1], [0, 0, 1, 1], [], []>} : vector<8x32xf32>, vector<32x2xf32>, vector<8x2xf32> -> vector<8x2xf32>
    %c0_21 = arith.constant 0 : index
    %c0_22 = arith.constant 0 : index
    %24 = vector.load %arg9[%c0_21, %c0_22] : memref<1x2xf32, #tpu.memory_space<vmem>>, vector<1x2xf32>
    %25 = vector.broadcast %24 : vector<1x2xf32> to vector<8x2xf32>
    %26 = arith.addf %23, %25 : vector<8x2xf32>
    %27 = tpu.iota {dimensions = array<i32: 1>} : vector<8x2xi32>
    %false = arith.constant false
    %28 = vector.broadcast %false : i1 to vector<8x2xi1>
    %c0_i32 = arith.constant 0 : i32
    %29 = vector.broadcast %c0_i32 : i32 to vector<8x2xi32>
    %30 = arith.cmpi eq, %27, %29 : vector<8x2xi32>
    %31 = arith.ori %28, %30 : vector<8x2xi1>
    %32 = arith.negf %26 : vector<8x2xf32>
    %33 = math.exp %32 : vector<8x2xf32>
    %cst_23 = arith.constant 1.000000e+00 : f32
    %34 = vector.broadcast %cst_23 : f32 to vector<8x2xf32>
    %35 = arith.addf %34, %33 : vector<8x2xf32>
    %36 = arith.divf %34, %35 : vector<8x2xf32>
    %37 = arith.select %31, %36, %26 : vector<8x2xi1>, vector<8x2xf32>
    %c0_24 = arith.constant 0 : index
    %c0_25 = arith.constant 0 : index
    %38 = vector.load %arg10[%c0_24, %c0_25] : memref<8x2xf32, #tpu.memory_space<vmem>>, vector<8x2xf32>
    tpu.vector_store %arg10[%c0_24, %c0_25], %37 {strides = array<i32>} : memref<8x2xf32, #tpu.memory_space<vmem>>, vector<8x2xf32>,
    return
  }
  func.func @transform_0(%arg0: i32) -> (i32, i32) {
    %c0_i32 = arith.constant 0 : i32
    %c0_i32_0 = arith.constant 0 : i32
    return %arg0, %c0_i32 : i32, i32
  }
  func.func @transform_1(%arg0: i32) -> (i32, i32) {
    %c0_i32 = arith.constant 0 : i32
    %c0_i32_0 = arith.constant 0 : i32
    %c0_i32_1 = arith.constant 0 : i32
    return %c0_i32, %c0_i32_0 : i32, i32
  }
  func.func @transform_2(%arg0: i32) -> (i32, i32) {
    %c0_i32 = arith.constant 0 : i32
    %c0_i32_0 = arith.constant 0 : i32
    %c0_i32_1 = arith.constant 0 : i32
    return %c0_i32, %c0_i32_0 : i32, i32
  }
  func.func @transform_3(%arg0: i32) -> (i32, i32) {
    %c0_i32 = arith.constant 0 : i32
    %c0_i32_0 = arith.constant 0 : i32
    %c0_i32_1 = arith.constant 0 : i32
    return %c0_i32, %c0_i32_0 : i32, i32
  }
  func.func @transform_4(%arg0: i32) -> (i32, i32) {
    %c0_i32 = arith.constant 0 : i32
    %c0_i32_0 = arith.constant 0 : i32
    %c0_i32_1 = arith.constant 0 : i32
    return %c0_i32, %c0_i32_0 : i32, i32
  }
  func.func @transform_5(%arg0: i32) -> (i32, i32) {
    %c0_i32 = arith.constant 0 : i32
    %c0_i32_0 = arith.constant 0 : i32
    %c0_i32_1 = arith.constant 0 : i32
    return %c0_i32, %c0_i32_0 : i32, i32
  }
  func.func @transform_6(%arg0: i32) -> (i32, i32) {
    %c0_i32 = arith.constant 0 : i32
    %c0_i32_0 = arith.constant 0 : i32
    %c0_i32_1 = arith.constant 0 : i32
    return %c0_i32, %c0_i32_0 : i32, i32
  }
  func.func @transform_7(%arg0: i32) -> (i32, i32) {
    %c0_i32 = arith.constant 0 : i32
    %c0_i32_0 = arith.constant 0 : i32
    %c0_i32_1 = arith.constant 0 : i32
    return %c0_i32, %c0_i32_0 : i32, i32
  }
  func.func @transform_8(%arg0: i32) -> (i32, i32) {
    %c0_i32 = arith.constant 0 : i32
    %c0_i32_0 = arith.constant 0 : i32
    %c0_i32_1 = arith.constant 0 : i32
    return %c0_i32, %c0_i32_0 : i32, i32
  }
  func.func @transform_9(%arg0: i32) -> (i32, i32) {
    %c0_i32 = arith.constant 0 : i32
    %c0_i32_0 = arith.constant 0 : i32
    return %arg0, %c0_i32 : i32, i32
  }
}

</mosaic_0001>

<llo_original>
// kernel: tpu_custom_call.1
$region0: #{tpu_custom_call.1}
  #allocation0 [shape = 'u32[]', space=smem, size = 0x4, offset = 0x4, fixed_abs, tag = 'smem constant byte address 0x4 - core index']
  #allocation1 [shape = 'u32[144,128]{1,0:T(1,128)}', space=vmem, size = 0x12000, scoped, tag = 'internal scratch']
  %s0 = inlined_call_operand.vmem [shape: f32[8,32], index: 0, kind: input, shape index: {}]
  %s1 = inlined_call_operand.vmem [shape: f32[32,64], index: 1, kind: input, shape index: {}]
  %s2 = inlined_call_operand.vmem [shape: f32[1,64], index: 2, kind: input, shape index: {}]
  %s3 = inlined_call_operand.vmem [shape: f32[64,32], index: 3, kind: input, shape index: {}]
  %s4 = inlined_call_operand.vmem [shape: f32[1,32], index: 4, kind: input, shape index: {}]
  %s5 = inlined_call_operand.vmem [shape: f32[32,32], index: 5, kind: input, shape index: {}]
  %s6 = inlined_call_operand.vmem [shape: f32[1,32], index: 6, kind: input, shape index: {}]
  %s7 = inlined_call_operand.vmem [shape: f32[32,2], index: 7, kind: input, shape index: {}]
  %s8 = inlined_call_operand.vmem [shape: f32[1,2], index: 8, kind: input, shape index: {}]
  %s9 = inlined_call_operand.vmem [shape: f32[8,2], index: 9, kind: output, shape index: {}]
  %s10 = sld [smem:[#allocation0]]
  $region46: #{tpu_custom_call.1} parent=0
    _
  %s12 = ssub.s32 1, %s10
  %s13 = scalar_select 0, %s12, %s10
  // Predicated region
  $region2: #{tpu_custom_call.1} parent=0 // pred_check
    _
  $region3: #{tpu_custom_call.1} parent=0 // pred_check_branch
    %15 = sbr.rel (0) target = $region5
  $region4: #{tpu_custom_call.1} parent=0 // pred_region
    _
  $region5: #{tpu_custom_call.1} parent=0 // pred_fallthru
    _
  // Predicated region
  $region6: #{tpu_custom_call.1} parent=0 // pred_check
    _
  $region7: #{tpu_custom_call.1} parent=0 // pred_check_branch
    %17 = sbr.rel (0) target = $region9
  $region8: #{tpu_custom_call.1} parent=0 // pred_region
    _
  $region9: #{tpu_custom_call.1} parent=0 // pred_fallthru
    _
  // Predicated region
  $region10: #{tpu_custom_call.1} parent=0 // pred_check
    _
  $region11: #{tpu_custom_call.1} parent=0 // pred_check_branch
    %19 = sbr.rel (0) target = $region13
  $region12: #{tpu_custom_call.1} parent=0 // pred_region
    _
  $region13: #{tpu_custom_call.1} parent=0 // pred_fallthru
    _
  // Predicated region
  $region14: #{tpu_custom_call.1} parent=0 // pred_check
    _
  $region15: #{tpu_custom_call.1} parent=0 // pred_check_branch
    %21 = sbr.rel (0) target = $region17
  $region16: #{tpu_custom_call.1} parent=0 // pred_region
    _
  $region17: #{tpu_custom_call.1} parent=0 // pred_fallthru
    _
  // Predicated region
  $region18: #{tpu_custom_call.1} parent=0 // pred_check
    _
  $region19: #{tpu_custom_call.1} parent=0 // pred_check_branch
    %23 = sbr.rel (0) target = $region21
  $region20: #{tpu_custom_call.1} parent=0 // pred_region
    _
  $region21: #{tpu_custom_call.1} parent=0 // pred_fallthru
    _
  // Predicated region
  $region22: #{tpu_custom_call.1} parent=0 // pred_check
    _
  $region23: #{tpu_custom_call.1} parent=0 // pred_check_branch
    %25 = sbr.rel (0) target = $region25
  $region24: #{tpu_custom_call.1} parent=0 // pred_region
    _
  $region25: #{tpu_custom_call.1} parent=0 // pred_fallthru
    _
  // Predicated region
  $region26: #{tpu_custom_call.1} parent=0 // pred_check
    _
  $region27: #{tpu_custom_call.1} parent=0 // pred_check_branch
    %27 = sbr.rel (0) target = $region29
  $region28: #{tpu_custom_call.1} parent=0 // pred_region
    _
  $region29: #{tpu_custom_call.1} parent=0 // pred_fallthru
    _
  // Predicated region
  $region30: #{tpu_custom_call.1} parent=0 // pred_check
    _
  $region31: #{tpu_custom_call.1} parent=0 // pred_check_branch
    %29 = sbr.rel (0) target = $region33
  $region32: #{tpu_custom_call.1} parent=0 // pred_region
    _
  $region33: #{tpu_custom_call.1} parent=0 // pred_fallthru
    _
  // Predicated region
  $region34: #{tpu_custom_call.1} parent=0 // pred_check
    _
  $region35: #{tpu_custom_call.1} parent=0 // pred_check_branch
    %31 = sbr.rel (0) target = $region37
  $region36: #{tpu_custom_call.1} parent=0 // pred_region
    _
  $region37: #{tpu_custom_call.1} parent=0 // pred_fallthru
    _
  %v32 = vld [vmem:[%s0] sm:$0xff]
  %v33 = vld [vmem:[%s1] sm:$0xff]
  %v34 = vld [vmem:[%s1 + $0x8] sm:$0xff]
  %v35 = vld [vmem:[%s1 + $0x10] sm:$0xff]
  %v36 = vld [vmem:[%s1 + $0x18] sm:$0xff]
  %v37 = vld [vmem:[%s2] sm:$0x1]
  %v39 = vlaneseq
  %v40 = vshrl.u32 %v39, 7
  %v41 = vsub.s32 0, %v40
  %v42 = vrot.slane %v37, %v41
  %vm44 = vcmask 261120
  %v46 = vsel %vm44, %v32, 0
  %48 = vmatprep.subr.mxu0 0.0
  %49 = vmatpush1.msra.mxu0 %v33
  %50 = vmatprep.subr.mxu0 0.0
  %51 = vmatpush1.msra.mxu0 %v34
  %52 = vmatprep.subr.mxu0 0.0
  %53 = vmatpush1.msra.mxu0 %v35
  %54 = vmatprep.subr.mxu0 0.0
  %55 = vmatpush1.msra.mxu0 %v36
  %56 = vmatprep.subr.mxu0 0.0
  %57 = vmatpush1.msra.mxu0 0.0
  %58 = vmatprep.subr.mxu0 0.0
  %59 = vmatpush1.msra.mxu0 0.0
  %60 = vmatprep.subr.mxu0 0.0
  %61 = vmatpush1.msra.mxu0 0.0
  %62 = vmatprep.subr.mxu0 0.0
  %63 = vmatpush1.msra.mxu0 0.0
  %64 = vmatprep.subr.mxu0 0.0
  %65 = vmatpush1.msra.mxu0 0.0
  %66 = vmatprep.subr.mxu0 0.0
  %67 = vmatpush1.msra.mxu0 0.0
  %68 = vmatprep.subr.mxu0 0.0
  %69 = vmatpush1.msra.mxu0 0.0
  %70 = vmatprep.subr.mxu0 0.0
  %71 = vmatpush1.msra.mxu0 0.0
  %72 = vmatprep.subr.mxu0 0.0
  %73 = vmatpush1.msra.mxu0 0.0
  %74 = vmatprep.subr.mxu0 0.0
  %75 = vmatpush1.msra.mxu0 0.0
  %76 = vmatprep.subr.mxu0 0.0
  %77 = vmatpush1.msra.mxu0 0.0
  %78 = vmatprep.subr.mxu0 0.0
  %79 = vmatpush1.msra.mxu0 0.0
  %80 = vmatprep.subr.mxu0 0.0
  %81 = vmatpush1.msra.mxu0 0.0
  %82 = vmatprep.subr.mxu0 0.0
  %83 = vmatpush1.msra.mxu0 0.0
  %84 = vmatprep.subr.mxu0 0.0
  %85 = vmatpush1.msra.mxu0 0.0
  %86 = vmatprep.subr.mxu0 0.0
  %87 = vmatpush1.msra.mxu0 0.0
  %88 = vmatprep.subr.mxu0 0.0
  %89 = vmatpush1.msra.mxu0 0.0
  %90 = vmatprep.subr.mxu0 0.0
  %91 = vmatpush1.msra.mxu0 0.0
  %92 = vmatprep.subr.mxu0 0.0
  %93 = vmatpush1.msra.mxu0 0.0
  %94 = vmatprep.subr.mxu0 0.0
  %95 = vmatpush1.msra.mxu0 0.0
  %96 = vmatprep.subr.mxu0 0.0
  %97 = vmatpush1.msra.mxu0 0.0
  %98 = vmatprep.subr.mxu0 0.0
  %99 = vmatpush1.msra.mxu0 0.0
  %100 = vmatprep.subr.mxu0 0.0
  %101 = vmatpush1.msra.mxu0 0.0
  %102 = vmatprep.subr.mxu0 0.0
  %103 = vmatpush1.msra.mxu0 0.0
  %104 = vmatprep.subr.mxu0 0.0
  %105 = vmatpush1.msra.mxu0 0.0
  %106 = vmatprep.subr.mxu0 0.0
  %107 = vmatpush1.msra.mxu0 0.0
  %108 = vmatprep.subr.mxu0 0.0
  %109 = vmatpush1.msra.mxu0 0.0
  %110 = vmatprep.subr.mxu0 0.0
  %111 = vmatpush1.msra.mxu0 0.0
  %112 = vmatprep.mubr.f32.mxu0 0.0
  %113 = vmatmul.mubr.f32.gmra.mrb[0].mxu0 %v46
  %v114 = vpop.f32.mrb[0].mxu0
  %v115 = vadd.f32 %v42, %v114
  %v116 = vpop.f32.mrb[0].mxu0
  %117 = vdwg.mxu0
  %v118 = vmax.f32 %v115, 0.0
  %v119 = vld [vmem:[%s3] sm:$0xff]
  %v120 = vld [vmem:[%s3 + $0x8] sm:$0xff]
  %v121 = vld [vmem:[%s3 + $0x10] sm:$0xff]
  %v122 = vld [vmem:[%s3 + $0x18] sm:$0xff]
  %v123 = vld [vmem:[%s3 + $0x20] sm:$0xff]
  %v124 = vld [vmem:[%s3 + $0x28] sm:$0xff]
  %v125 = vld [vmem:[%s3 + $0x30] sm:$0xff]
  %v126 = vld [vmem:[%s3 + $0x38] sm:$0xff]
  %v127 = vld [vmem:[%s4] sm:$0x1]
  %v129 = vlaneseq
  %v130 = vshrl.u32 %v129, 7
  %v131 = vsub.s32 0, %v130
  %v132 = vrot.slane %v127, %v131
  %vm134 = vcmask 523264
  %v136 = vsel %vm134, %v118, 0
  %138 = vmatprep.subr.mxu0 0.0
  %139 = vmatpush1.msra.mxu0 %v119
  %140 = vmatprep.subr.mxu0 0.0
  %141 = vmatpush1.msra.mxu0 %v120
  %142 = vmatprep.subr.mxu0 0.0
  %143 = vmatpush1.msra.mxu0 %v121
  %144 = vmatprep.subr.mxu0 0.0
  %145 = vmatpush1.msra.mxu0 %v122
  %146 = vmatprep.subr.mxu0 0.0
  %147 = vmatpush1.msra.mxu0 %v123
  %148 = vmatprep.subr.mxu0 0.0
  %149 = vmatpush1.msra.mxu0 %v124
  %150 = vmatprep.subr.mxu0 0.0
  %151 = vmatpush1.msra.mxu0 %v125
  %152 = vmatprep.subr.mxu0 0.0
  %153 = vmatpush1.msra.mxu0 %v126
  %154 = vmatprep.subr.mxu0 0.0
  %155 = vmatpush1.msra.mxu0 0.0
  %156 = vmatprep.subr.mxu0 0.0
  %157 = vmatpush1.msra.mxu0 0.0
  %158 = vmatprep.subr.mxu0 0.0
  %159 = vmatpush1.msra.mxu0 0.0
  %160 = vmatprep.subr.mxu0 0.0
  %161 = vmatpush1.msra.mxu0 0.0
  %162 = vmatprep.subr.mxu0 0.0
  %163 = vmatpush1.msra.mxu0 0.0
  %164 = vmatprep.subr.mxu0 0.0
  %165 = vmatpush1.msra.mxu0 0.0
  %166 = vmatprep.subr.mxu0 0.0
  %167 = vmatpush1.msra.mxu0 0.0
  %168 = vmatprep.subr.mxu0 0.0
  %169 = vmatpush1.msra.mxu0 0.0
  %170 = vmatprep.subr.mxu0 0.0
  %171 = vmatpush1.msra.mxu0 0.0
  %172 = vmatprep.subr.mxu0 0.0
  %173 = vmatpush1.msra.mxu0 0.0
  %174 = vmatprep.subr.mxu0 0.0
  %175 = vmatpush1.msra.mxu0 0.0
  %176 = vmatprep.subr.mxu0 0.0
  %177 = vmatpush1.msra.mxu0 0.0
  %178 = vmatprep.subr.mxu0 0.0
  %179 = vmatpush1.msra.mxu0 0.0
  %180 = vmatprep.subr.mxu0 0.0
  %181 = vmatpush1.msra.mxu0 0.0
  %182 = vmatprep.subr.mxu0 0.0
  %183 = vmatpush1.msra.mxu0 0.0
  %184 = vmatprep.subr.mxu0 0.0
  %185 = vmatpush1.msra.mxu0 0.0
  %186 = vmatprep.subr.mxu0 0.0
  %187 = vmatpush1.msra.mxu0 0.0
  %188 = vmatprep.subr.mxu0 0.0
  %189 = vmatpush1.msra.mxu0 0.0
  %190 = vmatprep.subr.mxu0 0.0
  %191 = vmatpush1.msra.mxu0 0.0
  %192 = vmatprep.subr.mxu0 0.0
  %193 = vmatpush1.msra.mxu0 0.0
  %194 = vmatprep.subr.mxu0 0.0
  %195 = vmatpush1.msra.mxu0 0.0
  %196 = vmatprep.subr.mxu0 0.0
  %197 = vmatpush1.msra.mxu0 0.0
  %198 = vmatprep.subr.mxu0 0.0
  %199 = vmatpush1.msra.mxu0 0.0
  %200 = vmatprep.subr.mxu0 0.0
  %201 = vmatpush1.msra.mxu0 0.0
  %202 = vmatprep.mubr.f32.mxu0 0.0
  %203 = vmatmul.mubr.f32.gmra.mrb[0].mxu0 %v136
  %v204 = vpop.f32.mrb[0].mxu0
  %v205 = vadd.f32 %v132, %v204
  %v206 = vpop.f32.mrb[0].mxu0
  %207 = vdwg.mxu0
  %v208 = vmax.f32 %v205, 0.0
  %v209 = vld [vmem:[%s5] sm:$0xff]
  %v210 = vld [vmem:[%s5 + $0x8] sm:$0xff]
  %v211 = vld [vmem:[%s5 + $0x10] sm:$0xff]
  %v212 = vld [vmem:[%s5 + $0x18] sm:$0xff]
  %v213 = vld [vmem:[%s6] sm:$0x1]
  %v215 = vlaneseq
  %v216 = vshrl.u32 %v215, 7
  %v217 = vsub.s32 0, %v216
  %v218 = vrot.slane %v213, %v217
  %v221 = vsel %vm44, %v208, 0
  %223 = vmatprep.subr.mxu0 0.0
  %224 = vmatpush1.msra.mxu0 %v209
  %225 = vmatprep.subr.mxu0 0.0
  %226 = vmatpush1.msra.mxu0 %v210
  %227 = vmatprep.subr.mxu0 0.0
  %228 = vmatpush1.msra.mxu0 %v211
  %229 = vmatprep.subr.mxu0 0.0
  %230 = vmatpush1.msra.mxu0 %v212
  %231 = vmatprep.subr.mxu0 0.0
  %232 = vmatpush1.msra.mxu0 0.0
  %233 = vmatprep.subr.mxu0 0.0
  %234 = vmatpush1.msra.mxu0 0.0
  %235 = vmatprep.subr.mxu0 0.0
  %236 = vmatpush1.msra.mxu0 0.0
  %237 = vmatprep.subr.mxu0 0.0
  %238 = vmatpush1.msra.mxu0 0.0
  %239 = vmatprep.subr.mxu0 0.0
  %240 = vmatpush1.msra.mxu0 0.0
  %241 = vmatprep.subr.mxu0 0.0
  %242 = vmatpush1.msra.mxu0 0.0
  %243 = vmatprep.subr.mxu0 0.0
  %244 = vmatpush1.msra.mxu0 0.0
  %245 = vmatprep.subr.mxu0 0.0
  %246 = vmatpush1.msra.mxu0 0.0
  %247 = vmatprep.subr.mxu0 0.0
  %248 = vmatpush1.msra.mxu0 0.0
  %249 = vmatprep.subr.mxu0 0.0
  %250 = vmatpush1.msra.mxu0 0.0
  %251 = vmatprep.subr.mxu0 0.0
  %252 = vmatpush1.msra.mxu0 0.0
  %253 = vmatprep.subr.mxu0 0.0
  %254 = vmatpush1.msra.mxu0 0.0
  %255 = vmatprep.subr.mxu0 0.0
  %256 = vmatpush1.msra.mxu0 0.0
  %257 = vmatprep.subr.mxu0 0.0
  %258 = vmatpush1.msra.mxu0 0.0
  %259 = vmatprep.subr.mxu0 0.0
  %260 = vmatpush1.msra.mxu0 0.0
  %261 = vmatprep.subr.mxu0 0.0
  %262 = vmatpush1.msra.mxu0 0.0
  %263 = vmatprep.subr.mxu0 0.0
  %264 = vmatpush1.msra.mxu0 0.0
  %265 = vmatprep.subr.mxu0 0.0
  %266 = vmatpush1.msra.mxu0 0.0
  %267 = vmatprep.subr.mxu0 0.0
  %268 = vmatpush1.msra.mxu0 0.0
  %269 = vmatprep.subr.mxu0 0.0
  %270 = vmatpush1.msra.mxu0 0.0
  %271 = vmatprep.subr.mxu0 0.0
  %272 = vmatpush1.msra.mxu0 0.0
  %273 = vmatprep.subr.mxu0 0.0
  %274 = vmatpush1.msra.mxu0 0.0
  %275 = vmatprep.subr.mxu0 0.0
  %276 = vmatpush1.msra.mxu0 0.0
  %277 = vmatprep.subr.mxu0 0.0
  %278 = vmatpush1.msra.mxu0 0.0
  %279 = vmatprep.subr.mxu0 0.0
  %280 = vmatpush1.msra.mxu0 0.0
  %281 = vmatprep.subr.mxu0 0.0
  %282 = vmatpush1.msra.mxu0 0.0
  %283 = vmatprep.subr.mxu0 0.0
  %284 = vmatpush1.msra.mxu0 0.0
  %285 = vmatprep.subr.mxu0 0.0
  %286 = vmatpush1.msra.mxu0 0.0
  %287 = vmatprep.mubr.f32.mxu0 0.0
  %288 = vmatmul.mubr.f32.gmra.mrb[0].mxu0 %v221
  %v289 = vpop.f32.mrb[0].mxu0
  %v290 = vadd.f32 %v218, %v289
  %v291 = vpop.f32.mrb[0].mxu0
  %292 = vdwg.mxu0
  %v293 = vmax.f32 %v290, 0.0
  %v294 = vld [vmem:[%s7] sm:$0xff]
  %v295 = vld [vmem:[%s7 + $0x8] sm:$0xff]
  %v296 = vld [vmem:[%s7 + $0x10] sm:$0xff]
  %v297 = vld [vmem:[%s7 + $0x18] sm:$0xff]
  %v298 = vld [vmem:[%s8] sm:$0x1]
  %v300 = vlaneseq
  %v301 = vshrl.u32 %v300, 7
  %v302 = vsub.s32 0, %v301
  %v303 = vrot.slane %v298, %v302
  %v306 = vsel %vm44, %v293, 0
  %308 = vmatprep.subr.mxu0 0.0
  %309 = vmatpush1.msra.mxu0 %v294
  %310 = vmatprep.subr.mxu0 0.0
  %311 = vmatpush1.msra.mxu0 %v295
  %312 = vmatprep.subr.mxu0 0.0
  %313 = vmatpush1.msra.mxu0 %v296
  %314 = vmatprep.subr.mxu0 0.0
  %315 = vmatpush1.msra.mxu0 %v297
  %316 = vmatprep.subr.mxu0 0.0
  %317 = vmatpush1.msra.mxu0 0.0
  %318 = vmatprep.subr.mxu0 0.0
  %319 = vmatpush1.msra.mxu0 0.0
  %320 = vmatprep.subr.mxu0 0.0
  %321 = vmatpush1.msra.mxu0 0.0
  %322 = vmatprep.subr.mxu0 0.0
  %323 = vmatpush1.msra.mxu0 0.0
  %324 = vmatprep.subr.mxu0 0.0
  %325 = vmatpush1.msra.mxu0 0.0
  %326 = vmatprep.subr.mxu0 0.0
  %327 = vmatpush1.msra.mxu0 0.0
  %328 = vmatprep.subr.mxu0 0.0
  %329 = vmatpush1.msra.mxu0 0.0
  %330 = vmatprep.subr.mxu0 0.0
  %331 = vmatpush1.msra.mxu0 0.0
  %332 = vmatprep.subr.mxu0 0.0
  %333 = vmatpush1.msra.mxu0 0.0
  %334 = vmatprep.subr.mxu0 0.0
  %335 = vmatpush1.msra.mxu0 0.0
  %336 = vmatprep.subr.mxu0 0.0
  %337 = vmatpush1.msra.mxu0 0.0
  %338 = vmatprep.subr.mxu0 0.0
  %339 = vmatpush1.msra.mxu0 0.0
  %340 = vmatprep.subr.mxu0 0.0
  %341 = vmatpush1.msra.mxu0 0.0
  %342 = vmatprep.subr.mxu0 0.0
  %343 = vmatpush1.msra.mxu0 0.0
  %344 = vmatprep.subr.mxu0 0.0
  %345 = vmatpush1.msra.mxu0 0.0
  %346 = vmatprep.subr.mxu0 0.0
  %347 = vmatpush1.msra.mxu0 0.0
  %348 = vmatprep.subr.mxu0 0.0
  %349 = vmatpush1.msra.mxu0 0.0
  %350 = vmatprep.subr.mxu0 0.0
  %351 = vmatpush1.msra.mxu0 0.0
  %352 = vmatprep.subr.mxu0 0.0
  %353 = vmatpush1.msra.mxu0 0.0
  %354 = vmatprep.subr.mxu0 0.0
  %355 = vmatpush1.msra.mxu0 0.0
  %356 = vmatprep.subr.mxu0 0.0
  %357 = vmatpush1.msra.mxu0 0.0
  %358 = vmatprep.subr.mxu0 0.0
  %359 = vmatpush1.msra.mxu0 0.0
  %360 = vmatprep.subr.mxu0 0.0
  %361 = vmatpush1.msra.mxu0 0.0
  %362 = vmatprep.subr.mxu0 0.0
  %363 = vmatpush1.msra.mxu0 0.0
  %364 = vmatprep.subr.mxu0 0.0
  %365 = vmatpush1.msra.mxu0 0.0
  %366 = vmatprep.subr.mxu0 0.0
  %367 = vmatpush1.msra.mxu0 0.0
  %368 = vmatprep.subr.mxu0 0.0
  %369 = vmatpush1.msra.mxu0 0.0
  %370 = vmatprep.subr.mxu0 0.0
  %371 = vmatpush1.msra.mxu0 0.0
  %372 = vmatprep.mubr.f32.mxu0 0.0
  %373 = vmatmul.mubr.f32.gmra.mrb[0].mxu0 %v306
  %v374 = vpop.f32.mrb[0].mxu0
  %v375 = vadd.f32 %v303, %v374
  %v376 = vpop.f32.mrb[0].mxu0
  %377 = vdwg.mxu0
  %v378 = vlaneseq
  %v379 = vand.u32 %v378, 127
  %vm380 = vcmp.eq.s32.totalorder %v379, 0
  %v381 = vxor.u32 %v375, 2147483648
  %v382 = vmul.f32 %v381, 1.442695
  %v383 = vpow.pop %v382
  %v384 = vadd.f32 %v383, 1.0
  %v385 = vrcp.pop %v384
  %v386 = vmul.f32 1.0, %v385
  %v387 = vsel %vm380, %v386, %v375
  %vm388 = vcmask 15360
  %389 = vst.msk [vmem:[%s9] sm:$0xff] %vm388, %v387
  // Predicated region
  $region38: #{tpu_custom_call.1} parent=0 // pred_check
    _
  $region39: #{tpu_custom_call.1} parent=0 // pred_check_branch
    %391 = sbr.rel (0) target = $region41
  $region40: #{tpu_custom_call.1} parent=0 // pred_region
    _
  $region41: #{tpu_custom_call.1} parent=0 // pred_fallthru
    _
  // Predicated region
  $region42: #{tpu_custom_call.1} parent=0 // pred_check
    _
  $region43: #{tpu_custom_call.1} parent=0 // pred_check_branch
    %393 = sbr.rel (0) target = $region45
  $region44: #{tpu_custom_call.1} parent=0 // pred_region
    _
  $region45: #{tpu_custom_call.1} parent=0 // pred_fallthru
    _

</llo_original>
